<compile_context>
chip_gen: v6e
topology: v6e:2x2x1
jax: 0.10.0
libtpu: 0.0.40
codegen_flags: <defaults>
</compile_context>

<pallas_src>
import jax
import jax.numpy as jnp
from jax.experimental import pallas as pl
from jax.experimental.pallas import tpu as pltpu


def value_net_kernel(xT_ref, w1_ref, b1_ref, w2_ref, b2_ref, w3_ref, b3_ref,
                     o_ref):
    # xT_ref: (S, TILE_B) f32   batch on lanes (pipelined tile)
    # w1_ref: (H, S)  bf16      b1_ref: (H, 1) f32
    # w2_ref: (H, H)  bf16      b2_ref: (H, 1) f32
    # w3_ref: (H, 1)  f32       b3_ref: (1, 1) f32 in SMEM
    # o_ref : (1, TILE_B) f32
    xt = xT_ref[...].astype(jnp.bfloat16)

    # fc1 + relu : (H, S) @ (S, TILE_B) on the MXU, bf16 operands, f32 acc.
    h1 = jnp.dot(w1_ref[...], xt, preferred_element_type=jnp.float32)
    h1 = jnp.maximum(h1 + b1_ref[...], 0.0)               # (H, TILE_B) f32

    # fc2 + relu : (H, H) @ (H, TILE_B) on the MXU.
    h2 = jnp.dot(w2_ref[...], h1.astype(jnp.bfloat16),
                 preferred_element_type=jnp.float32)
    h2 = jnp.maximum(h2 + b2_ref[...], 0.0)                # (H, TILE_B) f32

    # fc3 (1 output unit): VPU multiply + sublane reduction -> (1, TILE_B)
    # lane-dense row.  Keeps the MXU free and avoids an N=1 matmul.
    v = jnp.sum(h2 * w3_ref[...], axis=0, keepdims=True)
    o_ref[...] = (v + b3_ref[0, 0]).astype(o_ref.dtype)


def value_net_forward(x, params, *, tile_b=512):
    """x: (B, n_states) float32.  params in PyTorch Linear layout."""
    B, S = x.shape
    w1, b1 = params["w1"], params["b1"]   # (H, S), (H,)
    w2, b2 = params["w2"], params["b2"]   # (H, H), (H,)
    w3, b3 = params["w3"], params["b3"]   # (1, H), (1,)
    H = w1.shape[0]

    # Batch tiling: single tile if B fits, otherwise 128-multiple lane tiles.
    if B > tile_b:
        if tile_b % 128 != 0:
            raise ValueError("tile_b must be a multiple of 128 when B > tile_b")
        tb = tile_b
    else:
        tb = B
    n_tiles = pl.cdiv(B, tb)
    Bp = n_tiles * tb

    # Batch-on-lanes layout; pad lanes so the grid divides evenly.
    xT = x.T                                      # (S, B)
    if Bp != B:
        xT = jnp.pad(xT, ((0, 0), (0, Bp - B)))

    # Pre-cast MXU weight operands once (outside the grid loop).
    w1_bf = w1.astype(jnp.bfloat16)
    w2_bf = w2.astype(jnp.bfloat16)

    flops = 2 * B * (S * H + H * H + H)
    bytes_accessed = 4 * (B * S + B) + 2 * (S * H + H * H) + 4 * (3 * H + 1)

    vmem = pltpu.MemorySpace.VMEM
    out = pl.pallas_call(
        value_net_kernel,
        out_shape=jax.ShapeDtypeStruct((1, Bp), jnp.float32),
        grid=(n_tiles,),
        in_specs=[
            pl.BlockSpec((S, tb), lambda i: (0, i)),           # x tile (pipelined)
            pl.BlockSpec(memory_space=vmem),                   # w1 bf16 (resident)
            pl.BlockSpec(memory_space=vmem),                   # b1
            pl.BlockSpec(memory_space=vmem),                   # w2 bf16 (resident)
            pl.BlockSpec(memory_space=vmem),                   # b2
            pl.BlockSpec(memory_space=vmem),                   # w3 column
            pl.BlockSpec(memory_space=pltpu.MemorySpace.SMEM), # b3 scalar
        ],
        out_specs=pl.BlockSpec((1, tb), lambda i: (0, i)),
        compiler_params=pltpu.CompilerParams(
            dimension_semantics=("parallel",)),
        cost_estimate=pl.CostEstimate(
            flops=flops, transcendentals=0, bytes_accessed=bytes_accessed),
    )(xT, w1_bf, b1.reshape(H, 1), w2_bf, b2.reshape(H, 1),
      w3.reshape(H, 1), b3.reshape(1, 1))

    return out[0, :B].reshape(B, 1)


def init_params(key, n_states, n_hiddens):
    """PyTorch-Linear-like uniform fan-in init, PyTorch (out, in) layout."""
    ks = jax.random.split(key, 6)

    def uinit(k, shape, fan_in):
        bound = 1.0 / jnp.sqrt(jnp.float32(fan_in))
        return jax.random.uniform(k, shape, jnp.float32, -bound, bound)

    return {
        "w1": uinit(ks[0], (n_hiddens, n_states), n_states),
        "b1": uinit(ks[1], (n_hiddens,), n_states),
        "w2": uinit(ks[2], (n_hiddens, n_hiddens), n_hiddens),
        "b2": uinit(ks[3], (n_hiddens,), n_hiddens),
        "w3": uinit(ks[4], (1, n_hiddens), n_hiddens),
        "b3": uinit(ks[5], (1,), n_hiddens),
    }


def value_net_ref(x, p):
    """Plain-JAX reference matching the PyTorch forward.  fc1/fc2 use bf16
    operands with f32 accumulation to mirror the kernel's MXU feeding."""
    def mm_bf16(a, b):
        return jnp.dot(a.astype(jnp.bfloat16), b.astype(jnp.bfloat16),
                       preferred_element_type=jnp.float32)

    h = jnp.maximum(mm_bf16(x, p["w1"].T) + p["b1"], 0.0)
    h = jnp.maximum(mm_bf16(h, p["w2"].T) + p["b2"], 0.0)
    return h @ p["w3"].T + p["b3"]


if __name__ == "__main__":
    n_states, n_hiddens = 4, 32

    key = jax.random.PRNGKey(0)
    k_params, k_x1, k_x2 = jax.random.split(key, 3)
    params = init_params(k_params, n_states, n_hiddens)

    # Small single-tile case (grid of 1).
    x_small = jax.random.normal(k_x1, (8, n_states), dtype=jnp.float32)
    out_small = jax.block_until_ready(value_net_forward(x_small, params))
    ref_small = value_net_ref(x_small, params)
    assert out_small.shape == (8, 1), out_small.shape
    assert jnp.allclose(out_small, ref_small, atol=1e-3, rtol=1e-3), \
        "mismatch vs reference (small)"

    # Multi-tile case exercising the batch grid + lane padding (B % tile_b != 0).
    x_big = jax.random.normal(k_x2, (300, n_states), dtype=jnp.float32)
    out_big = jax.block_until_ready(
        value_net_forward(x_big, params, tile_b=128))
    ref_big = value_net_ref(x_big, params)
    assert out_big.shape == (300, 1), out_big.shape
    assert jnp.allclose(out_big, ref_big, atol=1e-3, rtol=1e-3), \
        "mismatch vs reference (gridded)"

    print("KERNEL_OK")
</pallas_src>

<mosaic_0001>
module attributes {stable_mosaic.version = 11 : i64} {
  func.func @value_net_kernel(%arg0: i32, %arg1: memref<4x8xf32, #tpu.memory_space<vmem>>, %arg2: memref<32x4xbf16, #tpu.memory_space<vmem>>, %arg3: memref<32x1xf32, #tpu.memory_space<vmem>>, %arg4: memref<32x32xbf16, #tpu.memory_space<vmem>>, %arg5: memref<32x1xf32, #tpu.memory_space<vmem>>, %arg6: memref<32x1xf32, #tpu.memory_space<vmem>>, %arg7: memref<1x1xf32, #tpu.memory_space<smem>>, %arg8: memref<1x8xf32, #tpu.memory_space<vmem>>) attributes {dimension_semantics = [#tpu.dimension_semantics<parallel>], iteration_bounds = array<i64: 1>, scalar_prefetch = 0 : i64, scratch_operands = 0 : i64, tpu.core_type = #tpu.core_type<tc>, window_params = [{transform_indices = @transform_0, window_bounds = array<i64: 4, 8>}, {pipeline_mode = #tpu.pipeline_mode<synchronous>, transform_indices = @transform_1, window_bounds = array<i64: 32, 4>}, {pipeline_mode = #tpu.pipeline_mode<synchronous>, transform_indices = @transform_2, window_bounds = array<i64: 32, 1>}, {pipeline_mode = #tpu.pipeline_mode<synchronous>, transform_indices = @transform_3, window_bounds = array<i64: 32, 32>}, {pipeline_mode = #tpu.pipeline_mode<synchronous>, transform_indices = @transform_4, window_bounds = array<i64: 32, 1>}, {pipeline_mode = #tpu.pipeline_mode<synchronous>, transform_indices = @transform_5, window_bounds = array<i64: 32, 1>}, {transform_indices = @transform_6, window_bounds = array<i64: 1, 1>}, {transform_indices = @transform_7, window_bounds = array<i64: 1, 8>}]} {
    %c0 = arith.constant 0 : index
    %c0_0 = arith.constant 0 : index
    %0 = vector.load %arg1[%c0, %c0_0] : memref<4x8xf32, #tpu.memory_space<vmem>>, vector<4x8xf32>
    %1 = arith.truncf %0 : vector<4x8xf32> to vector<4x8xbf16>
    %c0_1 = arith.constant 0 : index
    %c0_2 = arith.constant 0 : index
    %2 = vector.load %arg2[%c0_1, %c0_2] : memref<32x4xbf16, #tpu.memory_space<vmem>>, vector<32x4xbf16>
    %cst = arith.constant dense<0.000000e+00> : vector<32x8xf32>
    %3 = tpu.matmul %2, %1, %cst {dimension_numbers = #tpu.dot_dimension_numbers<[1], [0], [0], [1], [0, 0, 1, 1], [], []>} : vector<32x4xbf16>, vector<4x8xbf16>, vector<32x8xf32> -> vector<32x8xf32>
    %c0_3 = arith.constant 0 : index
    %c0_4 = arith.constant 0 : index
    %4 = vector.load %arg3[%c0_3, %c0_4] : memref<32x1xf32, #tpu.memory_space<vmem>>, vector<32x1xf32>
    %5 = vector.broadcast %4 : vector<32x1xf32> to vector<32x8xf32>
    %6 = arith.addf %3, %5 : vector<32x8xf32>
    %cst_5 = arith.constant 0.000000e+00 : f32
    %7 = vector.broadcast %cst_5 : f32 to vector<32x8xf32>
    %8 = arith.maximumf %6, %7 : vector<32x8xf32>
    %c0_6 = arith.constant 0 : index
    %c0_7 = arith.constant 0 : index
    %9 = vector.load %arg4[%c0_6, %c0_7] : memref<32x32xbf16, #tpu.memory_space<vmem>>, vector<32x32xbf16>
    %10 = arith.truncf %8 : vector<32x8xf32> to vector<32x8xbf16>
    %cst_8 = arith.constant dense<0.000000e+00> : vector<32x8xf32>
    %11 = tpu.matmul %9, %10, %cst_8 {dimension_numbers = #tpu.dot_dimension_numbers<[1], [0], [0], [1], [0, 0, 1, 1], [], []>} : vector<32x32xbf16>, vector<32x8xbf16>, vector<32x8xf32> -> vector<32x8xf32>
    %c0_9 = arith.constant 0 : index
    %c0_10 = arith.constant 0 : index
    %12 = vector.load %arg5[%c0_9, %c0_10] : memref<32x1xf32, #tpu.memory_space<vmem>>, vector<32x1xf32>
    %13 = vector.broadcast %12 : vector<32x1xf32> to vector<32x8xf32>
    %14 = arith.addf %11, %13 : vector<32x8xf32>
    %cst_11 = arith.constant 0.000000e+00 : f32
    %15 = vector.broadcast %cst_11 : f32 to vector<32x8xf32>
    %16 = arith.maximumf %14, %15 : vector<32x8xf32>
    %c0_12 = arith.constant 0 : index
    %c0_13 = arith.constant 0 : index
    %17 = vector.load %arg6[%c0_12, %c0_13] : memref<32x1xf32, #tpu.memory_space<vmem>>, vector<32x1xf32>
    %18 = vector.broadcast %17 : vector<32x1xf32> to vector<32x8xf32>
    %19 = arith.mulf %16, %18 : vector<32x8xf32>
    %cst_14 = arith.constant dense<0.000000e+00> : vector<8xf32>
    %20 = vector.multi_reduction <add>, %19, %cst_14 [0] : vector<32x8xf32> to vector<8xf32>
    %21 = vector.shape_cast %20 : vector<8xf32> to vector<1x8xf32>
    %c0_15 = arith.constant 0 : index
    %c0_16 = arith.constant 0 : index
    %22 = memref.load %arg7[%c0_15, %c0_16] : memref<1x1xf32, #tpu.memory_space<smem>>
    %23 = vector.broadcast %22 : f32 to vector<1x8xf32>
    %24 = arith.addf %21, %23 : vector<1x8xf32>
    %c0_17 = arith.constant 0 : index
    %c0_18 = arith.constant 0 : index
    %25 = vector.load %arg8[%c0_17, %c0_18] : memref<1x8xf32, #tpu.memory_space<vmem>>, vector<1x8xf32>
    tpu.vector_store %arg8[%c0_17, %c0_18], %24 {strides = array<i32>} : memref<1x8xf32, #tpu.memory_space<vmem>>, vector<1x8xf32>,
    return
  }
  func.func @transform_0(%arg0: i32) -> (i32, i32) {
    %c0_i32 = arith.constant 0 : i32
    %c0_i32_0 = arith.constant 0 : i32
    return %c0_i32, %arg0 : i32, i32
  }
  func.func @transform_1(%arg0: i32) -> (i32, i32) {
    %c0_i32 = arith.constant 0 : i32
    %c0_i32_0 = arith.constant 0 : i32
    %c0_i32_1 = arith.constant 0 : i32
    return %c0_i32, %c0_i32_0 : i32, i32
  }
  func.func @transform_2(%arg0: i32) -> (i32, i32) {
    %c0_i32 = arith.constant 0 : i32
    %c0_i32_0 = arith.constant 0 : i32
    %c0_i32_1 = arith.constant 0 : i32
    return %c0_i32, %c0_i32_0 : i32, i32
  }
  func.func @transform_3(%arg0: i32) -> (i32, i32) {
    %c0_i32 = arith.constant 0 : i32
    %c0_i32_0 = arith.constant 0 : i32
    %c0_i32_1 = arith.constant 0 : i32
    return %c0_i32, %c0_i32_0 : i32, i32
  }
  func.func @transform_4(%arg0: i32) -> (i32, i32) {
    %c0_i32 = arith.constant 0 : i32
    %c0_i32_0 = arith.constant 0 : i32
    %c0_i32_1 = arith.constant 0 : i32
    return %c0_i32, %c0_i32_0 : i32, i32
  }
  func.func @transform_5(%arg0: i32) -> (i32, i32) {
    %c0_i32 = arith.constant 0 : i32
    %c0_i32_0 = arith.constant 0 : i32
    %c0_i32_1 = arith.constant 0 : i32
    return %c0_i32, %c0_i32_0 : i32, i32
  }
  func.func @transform_6(%arg0: i32) -> (i32, i32) {
    %c0_i32 = arith.constant 0 : i32
    %c0_i32_0 = arith.constant 0 : i32
    %c0_i32_1 = arith.constant 0 : i32
    return %c0_i32, %c0_i32_0 : i32, i32
  }
  func.func @transform_7(%arg0: i32) -> (i32, i32) {
    %c0_i32 = arith.constant 0 : i32
    %c0_i32_0 = arith.constant 0 : i32
    return %c0_i32, %arg0 : i32, i32
  }
}

</mosaic_0001>

<llo_original>
// kernel: tpu_custom_call.1
$region0: #{tpu_custom_call.1}
  #allocation0 [shape = 'u32[]', space=smem, size = 0x4, offset = 0x4, fixed_abs, tag = 'smem constant byte address 0x4 - core index']
  #allocation1 [shape = 'u32[144,128]{1,0:T(1,128)}', space=vmem, size = 0x12000, scoped, tag = 'internal scratch']
  #allocation2 [shape = 'f32[1,1]{1,0:T(1,128)S(6)}', space=smem, size = 0x200, scoped, tag = 'scoped memory for tpu_custom_call.1']
  %s0 = inlined_call_operand.vmem [shape: f32[4,8], index: 0, kind: input, shape index: {}]
  %s1 = inlined_call_operand.vmem [shape: bf16[32,4], index: 1, kind: input, shape index: {}]
  %s2 = inlined_call_operand.vmem [shape: f32[32,1], index: 2, kind: input, shape index: {}]
  %s3 = inlined_call_operand.vmem [shape: bf16[32,32], index: 3, kind: input, shape index: {}]
  %s4 = inlined_call_operand.vmem [shape: f32[32,1], index: 4, kind: input, shape index: {}]
  %s5 = inlined_call_operand.vmem [shape: f32[32,1], index: 5, kind: input, shape index: {}]
  %s6 = inlined_call_operand.<no memory space> [shape: f32[1,1], index: 6, kind: input, shape index: {}]
  %s7 = inlined_call_operand.hbm [shape: f32[1,8], index: 7, kind: output, shape index: {}]
  %s8 = sld [smem:[#allocation0]]
  $region38: #{tpu_custom_call.1} parent=0
    _
  %s10 = ssub.s32 1, %s8
  %s11 = scalar_select 0, %s10, %s8
  %12 = sst [smem:[#allocation2]] %s6
  $region1: #{tpu_custom_call.1} parent=0
    #allocation3 [shape = 'u8[512]{0}', space=vmem, size = 0x400, scoped, tag = 'output window, operand 0, single buffered']
    #allocation4 [shape = 's32[1]{0}', space=sflag, size = 0x4, scoped, tag = 'scoped memory for tpu_custom_call.1']
    %13 = vsyncpa [#allocation4], 0
    // Predicated region
    $region2: #{tpu_custom_call.1} parent=1 // pred_check
      _
    $region3: #{tpu_custom_call.1} parent=1 // pred_check_branch
      %15 = sbr.rel (0) target = $region5
    $region4: #{tpu_custom_call.1} parent=1 // pred_region
      _
    $region5: #{tpu_custom_call.1} parent=1 // pred_fallthru
      _
    // Predicated region
    $region6: #{tpu_custom_call.1} parent=1 // pred_check
      _
    $region7: #{tpu_custom_call.1} parent=1 // pred_check_branch
      %17 = sbr.rel (0) target = $region9
    $region8: #{tpu_custom_call.1} parent=1 // pred_region
      _
    $region9: #{tpu_custom_call.1} parent=1 // pred_fallthru
      _
    // Predicated region
    $region10: #{tpu_custom_call.1} parent=1 // pred_check
      _
    $region11: #{tpu_custom_call.1} parent=1 // pred_check_branch
      %19 = sbr.rel (0) target = $region13
    $region12: #{tpu_custom_call.1} parent=1 // pred_region
      _
    $region13: #{tpu_custom_call.1} parent=1 // pred_fallthru
      _
    // Predicated region
    $region14: #{tpu_custom_call.1} parent=1 // pred_check
      _
    $region15: #{tpu_custom_call.1} parent=1 // pred_check_branch
      %21 = sbr.rel (0) target = $region17
    $region16: #{tpu_custom_call.1} parent=1 // pred_region
      _
    $region17: #{tpu_custom_call.1} parent=1 // pred_fallthru
      _
    // Predicated region
    $region18: #{tpu_custom_call.1} parent=1 // pred_check
      _
    $region19: #{tpu_custom_call.1} parent=1 // pred_check_branch
      %23 = sbr.rel (0) target = $region21
    $region20: #{tpu_custom_call.1} parent=1 // pred_region
      _
    $region21: #{tpu_custom_call.1} parent=1 // pred_fallthru
      _
    // Predicated region
    $region22: #{tpu_custom_call.1} parent=1 // pred_check
      _
    $region23: #{tpu_custom_call.1} parent=1 // pred_check_branch
      %25 = sbr.rel (0) target = $region25
    $region24: #{tpu_custom_call.1} parent=1 // pred_region
      _
    $region25: #{tpu_custom_call.1} parent=1 // pred_fallthru
      _
    // Predicated region
    $region26: #{tpu_custom_call.1} parent=1 // pred_check
      _
    $region27: #{tpu_custom_call.1} parent=1 // pred_check_branch
      %27 = sbr.rel (0) target = $region29
    $region28: #{tpu_custom_call.1} parent=1 // pred_region
      _
    $region29: #{tpu_custom_call.1} parent=1 // pred_fallthru
      _
    %v29 = vld [vmem:[%s0] sm:$0xf]
    %v30 = vpack.c.bf16 %v29, %v29
    %v31 = vld [vmem:[%s1] sm:$0xf]
    %v32 = vld [vmem:[%s1 + $0x4] sm:$0xf]
    %v33 = vld [vmem:[%s1 + $0x8] sm:$0xf]
    %v34 = vld [vmem:[%s1 + $0xc] sm:$0xf]
    %v35 = vld [vmem:[%s2] sm:$0xff]
    %v36 = vld [vmem:[%s2 + $0x8] sm:$0xff]
    %v37 = vld [vmem:[%s2 + $0x10] sm:$0xff]
    %v38 = vld [vmem:[%s2 + $0x18] sm:$0xff]
    %40 = vset.pattern.permute.xlu0 0
    %41 = vperm.xlu0 %40, %v35
    %v42 = vpop.permute.xlu0 %41
    %45 = vset.pattern.permute.xlu0 0
    %46 = vperm.xlu0 %45, %v36
    %v47 = vpop.permute.xlu0 %46
    %50 = vset.pattern.permute.xlu0 0
    %51 = vperm.xlu0 %50, %v37
    %v52 = vpop.permute.xlu0 %51
    %55 = vset.pattern.permute.xlu0 0
    %56 = vperm.xlu0 %55, %v38
    %v57 = vpop.permute.xlu0 %56
    %v63 = vunpack.c.l.b16 %v31
    %v64 = vunpack.c.l.b16 %v32
    %v65 = vunpack.c.l.b16 %v33
    %v66 = vunpack.c.l.b16 %v34
    %v67 = vpack.c.b16 %v64, %v63
    %v68 = vpack.c.b16 %v66, %v65
    %vm69 = vcmask 31744
    %v71 = vsel %vm69, %v67, 0
    %v74 = vsel %vm69, %v68, 0
    %vm76 = vcmask 1041408
    %v78 = vsel %vm76, %v30, 0
    %80 = vmatprep.subr.bf16.mxu0 0
    %81 = vmatpush1.bf16.msra.mxu0 0
    %82 = vmatprep.subr.bf16.mxu0 0
    %83 = vmatpush1.bf16.msra.mxu0 0
    %84 = vmatprep.subr.bf16.mxu0 0
    %85 = vmatpush1.bf16.msra.mxu0 0
    %86 = vmatprep.subr.bf16.mxu0 0
    %87 = vmatpush1.bf16.msra.mxu0 0
    %88 = vmatprep.subr.bf16.mxu0 0
    %89 = vmatpush1.bf16.msra.mxu0 0
    %90 = vmatprep.subr.bf16.mxu0 0
    %91 = vmatpush1.bf16.msra.mxu0 0
    %92 = vmatprep.subr.bf16.mxu0 0
    %93 = vmatpush1.bf16.msra.mxu0 0
    %94 = vmatprep.subr.bf16.mxu0 0
    %95 = vmatpush1.bf16.msra.mxu0 %v78
    %96 = vmatprep.subr.bf16.mxu0 0
    %97 = vmatpush2.bf16.msra.mxu0 0
    %98 = vmatprep.subr.bf16.mxu0 0
    %99 = vmatpush2.bf16.msra.mxu0 0
    %100 = vmatprep.subr.bf16.mxu0 0
    %101 = vmatpush2.bf16.msra.mxu0 0
    %102 = vmatprep.subr.bf16.mxu0 0
    %103 = vmatpush2.bf16.msra.mxu0 0
    %104 = vmatprep.subr.bf16.mxu0 0
    %105 = vmatpush2.bf16.msra.mxu0 0
    %106 = vmatprep.subr.bf16.mxu0 0
    %107 = vmatpush2.bf16.msra.mxu0 0
    %108 = vmatprep.subr.bf16.mxu0 0
    %109 = vmatpush2.bf16.msra.mxu0 0
    %110 = vmatprep.subr.bf16.mxu0 0
    %111 = vmatpush2.bf16.msra.mxu0 0
    %112 = vmatprep.mubr.bf16.mxu0 0
    %113 = vmatmul.mubr.bf16.gmra.mxu0 %v71
    %v114 = vpop.f32.mrf.mxu0
    %v115 = vadd.f32 %v42, %v114
    %v116 = vpop.f32.mrf.mxu0
    %v117 = vpop.f32.mrf.mxu0
    %v118 = vadd.f32 %v47, %v117
    %v119 = vpop.f32.mrf.mxu0
    %120 = vmatprep.mubr.bf16.mxu0 0
    %121 = vmatmul.mubr.bf16.gmra.mxu0 %v74
    %v122 = vpop.f32.mrf.mxu0
    %v123 = vadd.f32 %v52, %v122
    %v124 = vpop.f32.mrf.mxu0
    %v125 = vpop.f32.mrf.mxu0
    %v126 = vadd.f32 %v57, %v125
    %v127 = vpop.f32.mrf.mxu0
    %128 = vdwg.mxu0
    %v129 = vmax.f32 %v115, 0.0
    %v130 = vmax.f32 %v118, 0.0
    %v131 = vmax.f32 %v123, 0.0
    %v132 = vmax.f32 %v126, 0.0
    %v133 = vld [vmem:[%s3] sm:$0xf]
    %v134 = vld [vmem:[%s3 + $0x4] sm:$0xf]
    %v135 = vld [vmem:[%s3 + $0x8] sm:$0xf]
    %v136 = vld [vmem:[%s3 + $0xc] sm:$0xf]
    %v137 = vpack.c.bf16 %v130, %v129
    %v138 = vpack.c.bf16 %v132, %v131
    %v139 = vld [vmem:[%s4] sm:$0xff]
    %v140 = vld [vmem:[%s4 + $0x8] sm:$0xff]
    %v141 = vld [vmem:[%s4 + $0x10] sm:$0xff]
    %v142 = vld [vmem:[%s4 + $0x18] sm:$0xff]
    %144 = vset.pattern.permute.xlu0 0
    %145 = vperm.xlu0 %144, %v139
    %v146 = vpop.permute.xlu0 %145
    %149 = vset.pattern.permute.xlu0 0
    %150 = vperm.xlu0 %149, %v140
    %v151 = vpop.permute.xlu0 %150
    %154 = vset.pattern.permute.xlu0 0
    %155 = vperm.xlu0 %154, %v141
    %v156 = vpop.permute.xlu0 %155
    %159 = vset.pattern.permute.xlu0 0
    %160 = vperm.xlu0 %159, %v142
    %v161 = vpop.permute.xlu0 %160
    %v167 = vunpack.c.l.b16 %v133
    %v168 = vunpack.c.l.b16 %v134
    %v169 = vunpack.c.l.b16 %v135
    %v170 = vunpack.c.l.b16 %v136
    %v171 = vpack.c.b16 %v168, %v167
    %v172 = vpack.c.b16 %v170, %v169
    %vm173 = vcmask 261120
    %v175 = vsel %vm173, %v171, 0
    %v178 = vsel %vm173, %v172, 0
    %180 = vmatprep.subr.bf16.mxu0 0
    %181 = vmatpush1.bf16.msra.mxu0 0
    %182 = vmatprep.subr.bf16.mxu0 0
    %183 = vmatpush1.bf16.msra.mxu0 0
    %184 = vmatprep.subr.bf16.mxu0 0
    %185 = vmatpush1.bf16.msra.mxu0 0
    %186 = vmatprep.subr.bf16.mxu0 0
    %187 = vmatpush1.bf16.msra.mxu0 0
    %188 = vmatprep.subr.bf16.mxu0 0
    %189 = vmatpush1.bf16.msra.mxu0 0
    %190 = vmatprep.subr.bf16.mxu0 0
    %191 = vmatpush1.bf16.msra.mxu0 0
    %192 = vmatprep.subr.bf16.mxu0 0
    %193 = vmatpush1.bf16.msra.mxu0 %v138
    %194 = vmatprep.subr.bf16.mxu0 0
    %195 = vmatpush1.bf16.msra.mxu0 %v137
    %196 = vmatprep.subr.bf16.mxu0 0
    %197 = vmatpush2.bf16.msra.mxu0 0
    %198 = vmatprep.subr.bf16.mxu0 0
    %199 = vmatpush2.bf16.msra.mxu0 0
    %200 = vmatprep.subr.bf16.mxu0 0
    %201 = vmatpush2.bf16.msra.mxu0 0
    %202 = vmatprep.subr.bf16.mxu0 0
    %203 = vmatpush2.bf16.msra.mxu0 0
    %204 = vmatprep.subr.bf16.mxu0 0
    %205 = vmatpush2.bf16.msra.mxu0 0
    %206 = vmatprep.subr.bf16.mxu0 0
    %207 = vmatpush2.bf16.msra.mxu0 0
    %208 = vmatprep.subr.bf16.mxu0 0
    %209 = vmatpush2.bf16.msra.mxu0 0
    %210 = vmatprep.subr.bf16.mxu0 0
    %211 = vmatpush2.bf16.msra.mxu0 0
    %212 = vmatprep.mubr.bf16.mxu0 0
    %213 = vmatmul.mubr.bf16.gmra.mxu0 %v175
    %v214 = vpop.f32.mrf.mxu0
    %v215 = vadd.f32 %v146, %v214
    %v216 = vpop.f32.mrf.mxu0
    %v217 = vpop.f32.mrf.mxu0
    %v218 = vadd.f32 %v151, %v217
    %v219 = vpop.f32.mrf.mxu0
    %220 = vmatprep.mubr.bf16.mxu0 0
    %221 = vmatmul.mubr.bf16.gmra.mxu0 %v178
    %v222 = vpop.f32.mrf.mxu0
    %v223 = vadd.f32 %v156, %v222
    %v224 = vpop.f32.mrf.mxu0
    %v225 = vpop.f32.mrf.mxu0
    %v226 = vadd.f32 %v161, %v225
    %v227 = vpop.f32.mrf.mxu0
    %228 = vdwg.mxu0
    %v229 = vmax.f32 %v215, 0.0
    %v230 = vmax.f32 %v218, 0.0
    %v231 = vmax.f32 %v223, 0.0
    %v232 = vmax.f32 %v226, 0.0
    %v233 = vld [vmem:[%s5] sm:$0xff]
    %v234 = vld [vmem:[%s5 + $0x8] sm:$0xff]
    %v235 = vld [vmem:[%s5 + $0x10] sm:$0xff]
    %v236 = vld [vmem:[%s5 + $0x18] sm:$0xff]
    %238 = vset.pattern.permute.xlu0 0
    %239 = vperm.xlu0 %238, %v233
    %v240 = vpop.permute.xlu0 %239
    %243 = vset.pattern.permute.xlu0 0
    %244 = vperm.xlu0 %243, %v234
    %v245 = vpop.permute.xlu0 %244
    %248 = vset.pattern.permute.xlu0 0
    %249 = vperm.xlu0 %248, %v235
    %v250 = vpop.permute.xlu0 %249
    %253 = vset.pattern.permute.xlu0 0
    %254 = vperm.xlu0 %253, %v236
    %v255 = vpop.permute.xlu0 %254
    %v257 = vmul.f32 %v229, %v240
    %v258 = vmul.f32 %v230, %v245
    %v259 = vmul.f32 %v231, %v250
    %v260 = vmul.f32 %v232, %v255
    %vm261 = vcmask 64512
    %v262 = vsel %vm261, %v257, 0.0
    %v263 = vsel %vm261, %v258, 0.0
    %v264 = vadd.f32 %v262, %v263
    %v265 = vsel %vm261, %v259, 0.0
    %v266 = vadd.f32 %v264, %v265
    %v267 = vsel %vm261, %v260, 0.0
    %v268 = vadd.f32 %v266, %v267
    %v269 = vrot.slane %v268, 4
    %v270 = vadd.f32 %v268, %v269
    %v271 = vrot.slane %v270, 2
    %v272 = vadd.f32 %v270, %v271
    %v273 = vrot.slane %v272, 1
    %v274 = vadd.f32 %v272, %v273
    %s275 = sld [smem:[#allocation2]]
    %v276 = vstv %s275
    %v277 = vadd.f32 %v274, %v276
    %vm278 = vcmask 57344
    %279 = vst.msk [vmem:[#allocation3] sm:$0x1] %vm278, %v277
    // Predicated region
    $region30: #{tpu_custom_call.1} parent=1 // pred_check
      _
    $region31: #{tpu_custom_call.1} parent=1 // pred_check_branch
      %281 = sbr.rel (0) target = $region33
    $region32: #{tpu_custom_call.1} parent=1 // pred_region
      %s283 = ssub.s32 16, 16
      %284 = vsyncadd [#allocation4], %s283
      %s286 = sshll.u32 [#allocation3], 4
      %s287 = int_to_ptr.vmem [resolvable:$true] %s286
      %289 = dma.vmem_to_hbm [thread:$0]  %s287, 16, %s7, [#allocation4]
    $region33: #{tpu_custom_call.1} parent=1 // pred_fallthru
      _
    // Predicated region
    $region34: #{tpu_custom_call.1} parent=1 // pred_check
      _
    $region35: #{tpu_custom_call.1} parent=1 // pred_check_branch
      %291 = sbr.rel (0) target = $region37
    $region36: #{tpu_custom_call.1} parent=1 // pred_region
      %292 = dma.done [#allocation4], 16
    $region37: #{tpu_custom_call.1} parent=1 // pred_fallthru
      _
    %293 = vsyncpa [#allocation4], 1

</llo_original>
